<compile_context>
chip_gen: v6e
topology: v6e:2x2x1
jax: 0.10.0
libtpu: 0.0.40
codegen_flags: <defaults>
</compile_context>

<pallas_src>
import functools

import jax
import jax.numpy as jnp
from jax.experimental import pallas as pl
from jax.experimental.pallas import tpu as pltpu


def linear_t_kernel(w_ref, b_ref, xt_ref, ot_ref):
    """y_t[j, :] = sum_k w[j, k] * x_t[k, :] + b[j]   (unrolled VPU FMAs).

    w_ref : SMEM [out_f, in_f]   (PyTorch-native nn.Linear layout, no transpose)
    b_ref : SMEM [out_f]
    xt_ref: VMEM [in_f, Bt]      (feature-major: batch on the lane axis)
    ot_ref: VMEM [out_f, Bt]     (lane-dense writeback)
    """
    out_f, in_f = w_ref.shape
    xt = xt_ref[...].astype(jnp.float32)          # [in_f, Bt]
    for j in range(out_f):                        # out_f == 2: fully unrolled
        acc = xt[0:1, :] * w_ref[j, 0]
        for k in range(1, in_f):                  # in_f == 10: fully unrolled
            acc = acc + xt[k : k + 1, :] * w_ref[j, k]
        ot_ref[j : j + 1, :] = (acc + b_ref[j]).astype(ot_ref.dtype)


def _forward_small(x_t, weight, bias):
    """Single un-gridded call: whole problem VMEM/SMEM-resident, minimal overhead."""
    in_f, B = x_t.shape
    out_f = weight.shape[0]
    return pl.pallas_call(
        linear_t_kernel,
        out_shape=jax.ShapeDtypeStruct((out_f, B), x_t.dtype),
        in_specs=[
            pl.BlockSpec(memory_space=pltpu.MemorySpace.SMEM),   # weight scalars
            pl.BlockSpec(memory_space=pltpu.MemorySpace.SMEM),   # bias scalars
            pl.BlockSpec(memory_space=pltpu.MemorySpace.VMEM),   # x_t
        ],
        out_specs=pl.BlockSpec(memory_space=pltpu.MemorySpace.VMEM),
    )(weight, bias, x_t)


def _forward_tiled(x_t, weight, bias, bt):
    """Batch-tiled path for large B. Weight/bias stay SMEM-resident across steps."""
    in_f, B = x_t.shape
    out_f = weight.shape[0]
    return pl.pallas_call(
        linear_t_kernel,
        out_shape=jax.ShapeDtypeStruct((out_f, B), x_t.dtype),
        grid=(pl.cdiv(B, bt),),
        in_specs=[
            pl.BlockSpec(memory_space=pltpu.MemorySpace.SMEM),   # weight scalars
            pl.BlockSpec(memory_space=pltpu.MemorySpace.SMEM),   # bias scalars
            pl.BlockSpec((in_f, bt), lambda i: (0, i)),          # x_t batch tiles
        ],
        out_specs=pl.BlockSpec((out_f, bt), lambda i: (0, i)),
        compiler_params=pltpu.CompilerParams(
            # Independent batch tiles -> shardable across v7x's 2 TensorCores;
            # measured no-op on single-TC v5e/v6e (big tiles already chosen).
            dimension_semantics=("parallel",),
        ),
    )(weight, bias, x_t)


@functools.partial(jax.jit, static_argnames=("batch_tile",))
def dummy_model_forward(x, weight, bias, *, batch_tile=16384):
    """y = x @ weight.T + bias  (PyTorch nn.Linear semantics).

    x:      [B, in_features]             float32
    weight: [out_features, in_features]  float32 (PyTorch-native layout)
    bias:   [out_features]               float32
    returns [B, out_features]            float32
    """
    B = x.shape[0]
    # Feature-major layout for the kernel (batch on the 128-wide lane axis).
    # A caller that already holds x feature-major could pass it directly and
    # consume the transposed [out_f, B] output, skipping both transposes.
    x_t = x.T
    # Lane axis of every block must be a multiple of 128.
    bt = max(128, (batch_tile // 128) * 128)
    if B <= bt:
        y_t = _forward_small(x_t, weight, bias)
    else:
        y_t = _forward_tiled(x_t, weight, bias, bt)
    return y_t.T


if __name__ == "__main__":
    key = jax.random.PRNGKey(0)
    k_x, k_w, k_b, k_x2 = jax.random.split(key, 4)

    in_f, out_f = 10, 2

    # Deterministic parameter init (mirrors nn.Linear's uniform(-1/sqrt(in), 1/sqrt(in))).
    bound = 1.0 / jnp.sqrt(float(in_f))
    weight = jax.random.uniform(k_w, (out_f, in_f), jnp.float32, -bound, bound)
    bias = jax.random.uniform(k_b, (out_f,), jnp.float32, -bound, bound)

    # Nominal small-batch use case -> single un-gridded call.
    B = 8
    x = jax.random.normal(k_x, (B, in_f), jnp.float32)
    y = dummy_model_forward(x, weight, bias)
    jax.block_until_ready(y)
    y_ref = x @ weight.T + bias
    assert y.shape == (B, out_f)
    assert jnp.allclose(y, y_ref, atol=1e-5, rtol=1e-5)

    # Exercise the batch-tiled (gridded, megacore-shardable) path once too,
    # with a small explicit tile so the test stays tiny (grid of 4 steps).
    B_big = 1024
    x_big = jax.random.normal(k_x2, (B_big, in_f), jnp.float32)
    y_big = dummy_model_forward(x_big, weight, bias, batch_tile=256)
    jax.block_until_ready(y_big)
    y_big_ref = x_big @ weight.T + bias
    assert y_big.shape == (B_big, out_f)
    assert jnp.allclose(y_big, y_big_ref, atol=1e-5, rtol=1e-5)

    print("KERNEL_OK")
</pallas_src>

<mosaic_0001>
module attributes {stable_mosaic.version = 11 : i64} {
  func.func @linear_t_kernel(%arg0: memref<2x10xf32, #tpu.memory_space<smem>>, %arg1: memref<2xf32, #tpu.memory_space<smem>>, %arg2: memref<10x8xf32, #tpu.memory_space<vmem>>, %arg3: memref<2x8xf32, #tpu.memory_space<vmem>>) attributes {dimension_semantics = [], scalar_prefetch = 0 : i64, scratch_operands = 0 : i64, tpu.core_type = #tpu.core_type<tc>} {
    %c0 = arith.constant 0 : index
    %c0_0 = arith.constant 0 : index
    %0 = vector.load %arg2[%c0, %c0_0] : memref<10x8xf32, #tpu.memory_space<vmem>>, vector<10x8xf32>
    %1 = vector.extract_strided_slice %0 {offsets = [0, 0], sizes = [1, 8], strides = [1, 1]} : vector<10x8xf32> to vector<1x8xf32>
    %c0_1 = arith.constant 0 : index
    %c0_2 = arith.constant 0 : index
    %2 = memref.load %arg0[%c0_1, %c0_2] : memref<2x10xf32, #tpu.memory_space<smem>>
    %3 = vector.broadcast %2 : f32 to vector<1x8xf32>
    %4 = arith.mulf %1, %3 : vector<1x8xf32>
    %5 = vector.extract_strided_slice %0 {offsets = [1, 0], sizes = [1, 8], strides = [1, 1]} : vector<10x8xf32> to vector<1x8xf32>
    %c0_3 = arith.constant 0 : index
    %c1 = arith.constant 1 : index
    %6 = memref.load %arg0[%c0_3, %c1] : memref<2x10xf32, #tpu.memory_space<smem>>
    %7 = vector.broadcast %6 : f32 to vector<1x8xf32>
    %8 = arith.mulf %5, %7 : vector<1x8xf32>
    %9 = arith.addf %4, %8 : vector<1x8xf32>
    %10 = vector.extract_strided_slice %0 {offsets = [2, 0], sizes = [1, 8], strides = [1, 1]} : vector<10x8xf32> to vector<1x8xf32>
    %c0_4 = arith.constant 0 : index
    %c2 = arith.constant 2 : index
    %11 = memref.load %arg0[%c0_4, %c2] : memref<2x10xf32, #tpu.memory_space<smem>>
    %12 = vector.broadcast %11 : f32 to vector<1x8xf32>
    %13 = arith.mulf %10, %12 : vector<1x8xf32>
    %14 = arith.addf %9, %13 : vector<1x8xf32>
    %15 = vector.extract_strided_slice %0 {offsets = [3, 0], sizes = [1, 8], strides = [1, 1]} : vector<10x8xf32> to vector<1x8xf32>
    %c0_5 = arith.constant 0 : index
    %c3 = arith.constant 3 : index
    %16 = memref.load %arg0[%c0_5, %c3] : memref<2x10xf32, #tpu.memory_space<smem>>
    %17 = vector.broadcast %16 : f32 to vector<1x8xf32>
    %18 = arith.mulf %15, %17 : vector<1x8xf32>
    %19 = arith.addf %14, %18 : vector<1x8xf32>
    %20 = vector.extract_strided_slice %0 {offsets = [4, 0], sizes = [1, 8], strides = [1, 1]} : vector<10x8xf32> to vector<1x8xf32>
    %c0_6 = arith.constant 0 : index
    %c4 = arith.constant 4 : index
    %21 = memref.load %arg0[%c0_6, %c4] : memref<2x10xf32, #tpu.memory_space<smem>>
    %22 = vector.broadcast %21 : f32 to vector<1x8xf32>
    %23 = arith.mulf %20, %22 : vector<1x8xf32>
    %24 = arith.addf %19, %23 : vector<1x8xf32>
    %25 = vector.extract_strided_slice %0 {offsets = [5, 0], sizes = [1, 8], strides = [1, 1]} : vector<10x8xf32> to vector<1x8xf32>
    %c0_7 = arith.constant 0 : index
    %c5 = arith.constant 5 : index
    %26 = memref.load %arg0[%c0_7, %c5] : memref<2x10xf32, #tpu.memory_space<smem>>
    %27 = vector.broadcast %26 : f32 to vector<1x8xf32>
    %28 = arith.mulf %25, %27 : vector<1x8xf32>
    %29 = arith.addf %24, %28 : vector<1x8xf32>
    %30 = vector.extract_strided_slice %0 {offsets = [6, 0], sizes = [1, 8], strides = [1, 1]} : vector<10x8xf32> to vector<1x8xf32>
    %c0_8 = arith.constant 0 : index
    %c6 = arith.constant 6 : index
    %31 = memref.load %arg0[%c0_8, %c6] : memref<2x10xf32, #tpu.memory_space<smem>>
    %32 = vector.broadcast %31 : f32 to vector<1x8xf32>
    %33 = arith.mulf %30, %32 : vector<1x8xf32>
    %34 = arith.addf %29, %33 : vector<1x8xf32>
    %35 = vector.extract_strided_slice %0 {offsets = [7, 0], sizes = [1, 8], strides = [1, 1]} : vector<10x8xf32> to vector<1x8xf32>
    %c0_9 = arith.constant 0 : index
    %c7 = arith.constant 7 : index
    %36 = memref.load %arg0[%c0_9, %c7] : memref<2x10xf32, #tpu.memory_space<smem>>
    %37 = vector.broadcast %36 : f32 to vector<1x8xf32>
    %38 = arith.mulf %35, %37 : vector<1x8xf32>
    %39 = arith.addf %34, %38 : vector<1x8xf32>
    %40 = vector.extract_strided_slice %0 {offsets = [8, 0], sizes = [1, 8], strides = [1, 1]} : vector<10x8xf32> to vector<1x8xf32>
    %c0_10 = arith.constant 0 : index
    %c8 = arith.constant 8 : index
    %41 = memref.load %arg0[%c0_10, %c8] : memref<2x10xf32, #tpu.memory_space<smem>>
    %42 = vector.broadcast %41 : f32 to vector<1x8xf32>
    %43 = arith.mulf %40, %42 : vector<1x8xf32>
    %44 = arith.addf %39, %43 : vector<1x8xf32>
    %45 = vector.extract_strided_slice %0 {offsets = [9, 0], sizes = [1, 8], strides = [1, 1]} : vector<10x8xf32> to vector<1x8xf32>
    %c0_11 = arith.constant 0 : index
    %c9 = arith.constant 9 : index
    %46 = memref.load %arg0[%c0_11, %c9] : memref<2x10xf32, #tpu.memory_space<smem>>
    %47 = vector.broadcast %46 : f32 to vector<1x8xf32>
    %48 = arith.mulf %45, %47 : vector<1x8xf32>
    %49 = arith.addf %44, %48 : vector<1x8xf32>
    %c0_12 = arith.constant 0 : index
    %50 = memref.load %arg1[%c0_12] : memref<2xf32, #tpu.memory_space<smem>>
    %51 = vector.broadcast %50 : f32 to vector<1x8xf32>
    %52 = arith.addf %49, %51 : vector<1x8xf32>
    %c0_13 = arith.constant 0 : index
    %c0_14 = arith.constant 0 : index
    %53 = vector.load %arg3[%c0_13, %c0_14] : memref<2x8xf32, #tpu.memory_space<vmem>>, vector<1x8xf32>
    tpu.vector_store %arg3[%c0_13, %c0_14], %52 {strides = array<i32>} : memref<2x8xf32, #tpu.memory_space<vmem>>, vector<1x8xf32>,
    %54 = vector.extract_strided_slice %0 {offsets = [0, 0], sizes = [1, 8], strides = [1, 1]} : vector<10x8xf32> to vector<1x8xf32>
    %c1_15 = arith.constant 1 : index
    %c0_16 = arith.constant 0 : index
    %55 = memref.load %arg0[%c1_15, %c0_16] : memref<2x10xf32, #tpu.memory_space<smem>>
    %56 = vector.broadcast %55 : f32 to vector<1x8xf32>
    %57 = arith.mulf %54, %56 : vector<1x8xf32>
    %58 = vector.extract_strided_slice %0 {offsets = [1, 0], sizes = [1, 8], strides = [1, 1]} : vector<10x8xf32> to vector<1x8xf32>
    %c1_17 = arith.constant 1 : index
    %c1_18 = arith.constant 1 : index
    %59 = memref.load %arg0[%c1_17, %c1_18] : memref<2x10xf32, #tpu.memory_space<smem>>
    %60 = vector.broadcast %59 : f32 to vector<1x8xf32>
    %61 = arith.mulf %58, %60 : vector<1x8xf32>
    %62 = arith.addf %57, %61 : vector<1x8xf32>
    %63 = vector.extract_strided_slice %0 {offsets = [2, 0], sizes = [1, 8], strides = [1, 1]} : vector<10x8xf32> to vector<1x8xf32>
    %c1_19 = arith.constant 1 : index
    %c2_20 = arith.constant 2 : index
    %64 = memref.load %arg0[%c1_19, %c2_20] : memref<2x10xf32, #tpu.memory_space<smem>>
    %65 = vector.broadcast %64 : f32 to vector<1x8xf32>
    %66 = arith.mulf %63, %65 : vector<1x8xf32>
    %67 = arith.addf %62, %66 : vector<1x8xf32>
    %68 = vector.extract_strided_slice %0 {offsets = [3, 0], sizes = [1, 8], strides = [1, 1]} : vector<10x8xf32> to vector<1x8xf32>
    %c1_21 = arith.constant 1 : index
    %c3_22 = arith.constant 3 : index
    %69 = memref.load %arg0[%c1_21, %c3_22] : memref<2x10xf32, #tpu.memory_space<smem>>
    %70 = vector.broadcast %69 : f32 to vector<1x8xf32>
    %71 = arith.mulf %68, %70 : vector<1x8xf32>
    %72 = arith.addf %67, %71 : vector<1x8xf32>
    %73 = vector.extract_strided_slice %0 {offsets = [4, 0], sizes = [1, 8], strides = [1, 1]} : vector<10x8xf32> to vector<1x8xf32>
    %c1_23 = arith.constant 1 : index
    %c4_24 = arith.constant 4 : index
    %74 = memref.load %arg0[%c1_23, %c4_24] : memref<2x10xf32, #tpu.memory_space<smem>>
    %75 = vector.broadcast %74 : f32 to vector<1x8xf32>
    %76 = arith.mulf %73, %75 : vector<1x8xf32>
    %77 = arith.addf %72, %76 : vector<1x8xf32>
    %78 = vector.extract_strided_slice %0 {offsets = [5, 0], sizes = [1, 8], strides = [1, 1]} : vector<10x8xf32> to vector<1x8xf32>
    %c1_25 = arith.constant 1 : index
    %c5_26 = arith.constant 5 : index
    %79 = memref.load %arg0[%c1_25, %c5_26] : memref<2x10xf32, #tpu.memory_space<smem>>
    %80 = vector.broadcast %79 : f32 to vector<1x8xf32>
    %81 = arith.mulf %78, %80 : vector<1x8xf32>
    %82 = arith.addf %77, %81 : vector<1x8xf32>
    %83 = vector.extract_strided_slice %0 {offsets = [6, 0], sizes = [1, 8], strides = [1, 1]} : vector<10x8xf32> to vector<1x8xf32>
    %c1_27 = arith.constant 1 : index
    %c6_28 = arith.constant 6 : index
    %84 = memref.load %arg0[%c1_27, %c6_28] : memref<2x10xf32, #tpu.memory_space<smem>>
    %85 = vector.broadcast %84 : f32 to vector<1x8xf32>
    %86 = arith.mulf %83, %85 : vector<1x8xf32>
    %87 = arith.addf %82, %86 : vector<1x8xf32>
    %88 = vector.extract_strided_slice %0 {offsets = [7, 0], sizes = [1, 8], strides = [1, 1]} : vector<10x8xf32> to vector<1x8xf32>
    %c1_29 = arith.constant 1 : index
    %c7_30 = arith.constant 7 : index
    %89 = memref.load %arg0[%c1_29, %c7_30] : memref<2x10xf32, #tpu.memory_space<smem>>
    %90 = vector.broadcast %89 : f32 to vector<1x8xf32>
    %91 = arith.mulf %88, %90 : vector<1x8xf32>
    %92 = arith.addf %87, %91 : vector<1x8xf32>
    %93 = vector.extract_strided_slice %0 {offsets = [8, 0], sizes = [1, 8], strides = [1, 1]} : vector<10x8xf32> to vector<1x8xf32>
    %c1_31 = arith.constant 1 : index
    %c8_32 = arith.constant 8 : index
    %94 = memref.load %arg0[%c1_31, %c8_32] : memref<2x10xf32, #tpu.memory_space<smem>>
    %95 = vector.broadcast %94 : f32 to vector<1x8xf32>
    %96 = arith.mulf %93, %95 : vector<1x8xf32>
    %97 = arith.addf %92, %96 : vector<1x8xf32>
    %98 = vector.extract_strided_slice %0 {offsets = [9, 0], sizes = [1, 8], strides = [1, 1]} : vector<10x8xf32> to vector<1x8xf32>
    %c1_33 = arith.constant 1 : index
    %c9_34 = arith.constant 9 : index
    %99 = memref.load %arg0[%c1_33, %c9_34] : memref<2x10xf32, #tpu.memory_space<smem>>
    %100 = vector.broadcast %99 : f32 to vector<1x8xf32>
    %101 = arith.mulf %98, %100 : vector<1x8xf32>
    %102 = arith.addf %97, %101 : vector<1x8xf32>
    %c1_35 = arith.constant 1 : index
    %103 = memref.load %arg1[%c1_35] : memref<2xf32, #tpu.memory_space<smem>>
    %104 = vector.broadcast %103 : f32 to vector<1x8xf32>
    %105 = arith.addf %102, %104 : vector<1x8xf32>
    %c1_36 = arith.constant 1 : index
    %c0_37 = arith.constant 0 : index
    %106 = vector.load %arg3[%c1_36, %c0_37] : memref<2x8xf32, #tpu.memory_space<vmem>>, vector<1x8xf32>
    tpu.vector_store %arg3[%c1_36, %c0_37], %105 {strides = array<i32>} : memref<2x8xf32, #tpu.memory_space<vmem>>, vector<1x8xf32>,
    return
  }
}

</mosaic_0001>

<llo_original>
// kernel: dummy_model_forward.1
$region0: #{dummy_model_forward.1}
  #allocation0 [shape = 'u32[]', space=smem, size = 0x4, offset = 0x4, fixed_abs, tag = 'smem constant byte address 0x4 - core index']
  #allocation1 [shape = 'u32[144,128]{1,0:T(1,128)}', space=vmem, size = 0x12000, scoped, tag = 'internal scratch']
  %s0 = inlined_call_operand.vmem [shape: f32[2,10], index: 0, kind: input, shape index: {}]
  %s1 = inlined_call_operand.vmem [shape: f32[2], index: 1, kind: input, shape index: {}]
  %s2 = inlined_call_operand.vmem [shape: f32[10,8], index: 2, kind: input, shape index: {}]
  %s3 = inlined_call_operand.hbm [shape: f32[2,8], index: 3, kind: output, shape index: {}]
  %s4 = sld [smem:[#allocation0]]
  $region30: #{dummy_model_forward.1} parent=0
    _
  %s6 = ssub.s32 1, %s4
  %s7 = scalar_select 0, %s6, %s4
  $region1: #{dummy_model_forward.1} parent=0
    #allocation2 [shape = 'u8[1024]{0}', space=smem, size = 0x400, scoped, tag = 'input window, operand 0, single buffered']
    #allocation3 [shape = 's32[1]{0}', space=sflag, size = 0x4, scoped, tag = 'scoped memory for dummy_model_forward.1']
    #allocation4 [shape = 's32[1]{0}', space=sflag, size = 0x4, scoped, tag = 'scoped memory for dummy_model_forward.1']
    #allocation5 [shape = 'u8[512]{0}', space=smem, size = 0x200, scoped, tag = 'input window, operand 1, single buffered']
    #allocation6 [shape = 's32[1]{0}', space=sflag, size = 0x4, scoped, tag = 'scoped memory for dummy_model_forward.1']
    #allocation7 [shape = 'u8[1024]{0}', space=vmem, size = 0x400, scoped, tag = 'output window, operand 0, single buffered']
    %8 = vsyncpa [#allocation4], 0
    %9 = vsyncpa [#allocation6], 0
    %10 = vsyncpa [#allocation3], 0
    // Predicated region
    $region2: #{dummy_model_forward.1} parent=1 // pred_check
      _
    $region3: #{dummy_model_forward.1} parent=1 // pred_check_branch
      %12 = sbr.rel (0) target = $region5
    $region4: #{dummy_model_forward.1} parent=1 // pred_region
      %s14 = ssub.s32 32, 32
      %15 = vsyncadd [#allocation4], %s14
      %s17 = sshll.u32 %s0, 4
      %s18 = int_to_ptr.vmem [resolvable:$true] %s17
      %20 = dma.vmem_to_smem %s18, 32, [#allocation2], [#allocation4]
    $region5: #{dummy_model_forward.1} parent=1 // pred_fallthru
      _
    // Predicated region
    $region6: #{dummy_model_forward.1} parent=1 // pred_check
      _
    $region7: #{dummy_model_forward.1} parent=1 // pred_check_branch
      %22 = sbr.rel (0) target = $region9
    $region8: #{dummy_model_forward.1} parent=1 // pred_region
      %s24 = ssub.s32 16, 16
      %25 = vsyncadd [#allocation6], %s24
      %s27 = sshll.u32 %s1, 4
      %s28 = int_to_ptr.vmem [resolvable:$true] %s27
      %30 = dma.vmem_to_smem %s28, 16, [#allocation5], [#allocation6]
    $region9: #{dummy_model_forward.1} parent=1 // pred_fallthru
      _
    // Predicated region
    $region10: #{dummy_model_forward.1} parent=1 // pred_check
      _
    $region11: #{dummy_model_forward.1} parent=1 // pred_check_branch
      %32 = sbr.rel (0) target = $region13
    $region12: #{dummy_model_forward.1} parent=1 // pred_region
      _
    $region13: #{dummy_model_forward.1} parent=1 // pred_fallthru
      _
    // Predicated region
    $region14: #{dummy_model_forward.1} parent=1 // pred_check
      _
    $region15: #{dummy_model_forward.1} parent=1 // pred_check_branch
      %34 = sbr.rel (0) target = $region17
    $region16: #{dummy_model_forward.1} parent=1 // pred_region
      %35 = dma.done [#allocation4], 32
    $region17: #{dummy_model_forward.1} parent=1 // pred_fallthru
      _
    // Predicated region
    $region18: #{dummy_model_forward.1} parent=1 // pred_check
      _
    $region19: #{dummy_model_forward.1} parent=1 // pred_check_branch
      %37 = sbr.rel (0) target = $region21
    $region20: #{dummy_model_forward.1} parent=1 // pred_region
      %38 = dma.done [#allocation6], 16
    $region21: #{dummy_model_forward.1} parent=1 // pred_fallthru
      _
    %39 = sfence
    %v40 = vld [vmem:[%s2] sm:$0xff]
    %v41 = vld [vmem:[%s2 + $0x8] sm:$0x3]
    %s42 = sld [smem:[#allocation2]]
    %v43 = vstv %s42
    %v44 = vmul.f32 %v40, %v43
    %s45 = sld [smem:[#allocation2 + $0x1]]
    %v46 = vstv %s45
    %v47 = vmul.f32 %v40, %v46
    %v49 = vrot.slane %v47, 1
    %v51 = vadd.f32 %v44, %v49
    %s52 = sld [smem:[#allocation2 + $0x2]]
    %v53 = vstv %s52
    %v54 = vmul.f32 %v40, %v53
    %v56 = vrot.slane %v54, 2
    %v58 = vadd.f32 %v51, %v56
    %s59 = sld [smem:[#allocation2 + $0x3]]
    %v60 = vstv %s59
    %v61 = vmul.f32 %v40, %v60
    %v63 = vrot.slane %v61, 3
    %v65 = vadd.f32 %v58, %v63
    %s66 = sld [smem:[#allocation2 + $0x4]]
    %v67 = vstv %s66
    %v68 = vmul.f32 %v40, %v67
    %v70 = vrot.slane %v68, 4
    %v72 = vadd.f32 %v65, %v70
    %s73 = sld [smem:[#allocation2 + $0x5]]
    %v74 = vstv %s73
    %v75 = vmul.f32 %v40, %v74
    %v77 = vrot.slane %v75, 5
    %v79 = vadd.f32 %v72, %v77
    %s80 = sld [smem:[#allocation2 + $0x6]]
    %v81 = vstv %s80
    %v82 = vmul.f32 %v40, %v81
    %v84 = vrot.slane %v82, 6
    %v86 = vadd.f32 %v79, %v84
    %s87 = sld [smem:[#allocation2 + $0x7]]
    %v88 = vstv %s87
    %v89 = vmul.f32 %v40, %v88
    %v91 = vrot.slane %v89, 7
    %v93 = vadd.f32 %v86, %v91
    %s94 = sld [smem:[#allocation2 + $0x8]]
    %v95 = vstv %s94
    %v96 = vmul.f32 %v41, %v95
    %v97 = vadd.f32 %v93, %v96
    %s98 = sld [smem:[#allocation2 + $0x9]]
    %v99 = vstv %s98
    %v100 = vmul.f32 %v41, %v99
    %v102 = vrot.slane %v100, 1
    %v104 = vadd.f32 %v97, %v102
    %s105 = sld [smem:[#allocation5]]
    %v106 = vstv %s105
    %v107 = vadd.f32 %v104, %v106
    %vm108 = vcmask 57344
    %109 = vst.msk [vmem:[#allocation7] sm:$0x1] %vm108, %v107
    %s110 = sld [smem:[#allocation2 + $0x80]]
    %v111 = vstv %s110
    %v112 = vmul.f32 %v40, %v111
    %s113 = sld [smem:[#allocation2 + $0x81]]
    %v114 = vstv %s113
    %v115 = vmul.f32 %v40, %v114
    %v117 = vrot.slane %v115, 1
    %v119 = vadd.f32 %v112, %v117
    %s120 = sld [smem:[#allocation2 + $0x82]]
    %v121 = vstv %s120
    %v122 = vmul.f32 %v40, %v121
    %v124 = vrot.slane %v122, 2
    %v126 = vadd.f32 %v119, %v124
    %s127 = sld [smem:[#allocation2 + $0x83]]
    %v128 = vstv %s127
    %v129 = vmul.f32 %v40, %v128
    %v131 = vrot.slane %v129, 3
    %v133 = vadd.f32 %v126, %v131
    %s134 = sld [smem:[#allocation2 + $0x84]]
    %v135 = vstv %s134
    %v136 = vmul.f32 %v40, %v135
    %v138 = vrot.slane %v136, 4
    %v140 = vadd.f32 %v133, %v138
    %s141 = sld [smem:[#allocation2 + $0x85]]
    %v142 = vstv %s141
    %v143 = vmul.f32 %v40, %v142
    %v145 = vrot.slane %v143, 5
    %v147 = vadd.f32 %v140, %v145
    %s148 = sld [smem:[#allocation2 + $0x86]]
    %v149 = vstv %s148
    %v150 = vmul.f32 %v40, %v149
    %v152 = vrot.slane %v150, 6
    %v154 = vadd.f32 %v147, %v152
    %s155 = sld [smem:[#allocation2 + $0x87]]
    %v156 = vstv %s155
    %v157 = vmul.f32 %v40, %v156
    %v159 = vrot.slane %v157, 7
    %v161 = vadd.f32 %v154, %v159
    %s162 = sld [smem:[#allocation2 + $0x88]]
    %v163 = vstv %s162
    %v164 = vmul.f32 %v41, %v163
    %v165 = vadd.f32 %v161, %v164
    %s166 = sld [smem:[#allocation2 + $0x89]]
    %v167 = vstv %s166
    %v168 = vmul.f32 %v41, %v167
    %v170 = vrot.slane %v168, 1
    %v172 = vadd.f32 %v165, %v170
    %s173 = sld [smem:[#allocation5 + $0x1]]
    %v174 = vstv %s173
    %v175 = vadd.f32 %v172, %v174
    %176 = vst.msk [vmem:[#allocation7 + $0x1] sm:$0x1] %vm108, %v175
    // Predicated region
    $region22: #{dummy_model_forward.1} parent=1 // pred_check
      _
    $region23: #{dummy_model_forward.1} parent=1 // pred_check_branch
      %178 = sbr.rel (0) target = $region25
    $region24: #{dummy_model_forward.1} parent=1 // pred_region
      %s180 = ssub.s32 32, 32
      %181 = vsyncadd [#allocation3], %s180
      %s183 = sshll.u32 [#allocation7], 4
      %s184 = int_to_ptr.vmem [resolvable:$true] %s183
      %186 = dma.vmem_to_hbm [thread:$0]  %s184, 32, %s3, [#allocation3]
    $region25: #{dummy_model_forward.1} parent=1 // pred_fallthru
      _
    // Predicated region
    $region26: #{dummy_model_forward.1} parent=1 // pred_check
      _
    $region27: #{dummy_model_forward.1} parent=1 // pred_check_branch
      %188 = sbr.rel (0) target = $region29
    $region28: #{dummy_model_forward.1} parent=1 // pred_region
      %189 = dma.done [#allocation3], 32
    $region29: #{dummy_model_forward.1} parent=1 // pred_fallthru
      _
    %190 = vsyncpa [#allocation3], 1
    %191 = vsyncpa [#allocation4], 1
    %192 = vsyncpa [#allocation6], 1

</llo_original>
